<compile_context>
chip_gen: v6e
topology: v6e:2x2x1
jax: 0.10.0
libtpu: 0.0.40
codegen_flags: <defaults>
</compile_context>

<pallas_src>
import functools

import jax
import jax.numpy as jnp
from jax import lax
from jax.experimental import pallas as pl
from jax.experimental.pallas import tpu as pltpu

LANE = 128
SLAB = 256            # rows per in-kernel matmul / stats / epilogue chunk


def _round_up(a, b):
    return (a + b - 1) // b * b


def _vmem_budget_bytes():
    # Generation-aware budget: ~75% of physical VMEM (v5e/v6e 128 MiB,
    # v7x 64 MiB).  Fallback assumes the smallest (v7x) if the query fails.
    try:
        cap = pltpu.get_tpu_info().vmem_capacity_bytes
    except Exception:
        cap = 64 * 1024 * 1024
    return int(cap * 0.75)


# ----------------------------- Pallas kernel --------------------------------
def _convblock_kernel(x_ref, w_ref, o_ref, sum_ref, ssq_ref, *,
                      tile_p, slab, p_real, eps, activation):
    # x_ref:   (tile_p, kd_pad)  bf16 im2col patch tile of one batch sample
    # w_ref:   (kd_pad, tile_c)  bf16 flattened conv-weight tile
    # o_ref:   (p_pad,  tile_c)  f32, resident across the P-tile grid axis
    # sum/ssq: (8, tile_c)       f32 running partial sums (per sublane row)
    p = pl.program_id(2)

    @pl.when(p == 0)
    def _init():
        sum_ref[...] = jnp.zeros_like(sum_ref)
        ssq_ref[...] = jnp.zeros_like(ssq_ref)

    base = pl.multiple_of(p * tile_p, tile_p)
    n_slabs = tile_p // slab

    def slab_step(r0):
        # Conv slab as an MXU matmul (bias omitted: cancelled by InstanceNorm).
        y = jnp.dot(x_ref[pl.ds(r0, slab), :], w_ref[...],
                    preferred_element_type=jnp.float32)      # (slab, tile_c)
        # VPU-only partial statistics: fold rows onto 8 sublanes, elementwise
        # accumulate; the cross-sublane reduce is deferred to the epilogue.
        folded = y.reshape(slab // 8, 8, y.shape[-1])
        sum_ref[...] += jnp.sum(folded, axis=0)
        ssq_ref[...] += jnp.sum(folded * folded, axis=0)
        o_ref[pl.ds(base + r0, slab), :] = y

    if n_slabs == 1:
        slab_step(0)
    else:
        @pl.loop(0, n_slabs)
        def _(s):
            slab_step(pl.multiple_of(s * slab, slab))

    @pl.when(p == pl.num_programs(2) - 1)
    def _epilogue():
        inv_p = jnp.float32(1.0 / p_real)
        mean = jnp.sum(sum_ref[...], axis=0, keepdims=True) * inv_p  # (1, tc)
        ex2 = jnp.sum(ssq_ref[...], axis=0, keepdims=True) * inv_p
        # Clamp: one-pass variance in f32 can go slightly negative.
        var = jnp.maximum(ex2 - mean * mean, 0.0)
        scale = lax.rsqrt(var + eps)

        def norm_slab(r0):
            yb = (o_ref[pl.ds(r0, slab), :] - mean) * scale
            if activation == "relu":
                yb = jnp.maximum(yb, 0.0)
            elif activation == "lrelu":
                yb = jnp.where(yb >= 0.0, yb, 0.2 * yb)
            elif activation == "tanh":
                yb = jnp.tanh(yb)
            # 'no_act': leave as-is
            o_ref[pl.ds(r0, slab), :] = yb

        n_out_slabs = o_ref.shape[0] // slab
        if n_out_slabs == 1:
            norm_slab(0)
        else:
            @pl.loop(0, n_out_slabs)
            def _(s):
                norm_slab(pl.multiple_of(s * slab, slab))


# ----------------------------- host wrapper ----------------------------------
def convblock_forward(x, weight, bias=None, *, stride=2, padding=1, eps=1e-5,
                      activation="relu", tile_p_max=1024):
    """activation(InstanceNorm2d(Conv2d(x, weight))).  x: NCHW, weight: OIHW.

    Implements the module's default batch_norm=True path.  `bias` is accepted
    for API parity but unused: non-affine InstanceNorm subtracts the
    per-channel mean, cancelling the conv bias exactly.
    """
    # TODO(synk): batch_norm=False path (Conv + bias + activation, no norm) is
    # not implemented; the bias must be applied there.
    del bias
    if activation not in ("relu", "lrelu", "tanh", "no_act"):
        raise ValueError(f"unsupported activation: {activation}")

    N, Cin, H, W = x.shape
    Cout, _, K, _ = weight.shape
    Ho = (H + 2 * padding - K) // stride + 1
    Wo = (W + 2 * padding - K) // stride + 1
    P = Ho * Wo
    Kd = Cin * K * K

    # ---- fused im2col producer (bf16, no extra f32 HBM passes) ----
    # TODO(synk): replace host-side im2col with in-kernel K*K-tap accumulation
    # over strided DMA slices of x to cut patch HBM reads ~9x (v5e bandwidth).
    patches = lax.conv_general_dilated_patches(
        x.astype(jnp.bfloat16),
        filter_shape=(K, K),
        window_strides=(stride, stride),
        padding=((padding, padding), (padding, padding)),
        dimension_numbers=("NCHW", "OIHW", "NHWC"),
    )                                                    # (N, Ho, Wo, Cin*K*K)
    patches = patches.reshape(N, P, Kd)

    # ---- TPU-friendly tile sizes ----
    kd_pad = _round_up(Kd, LANE)          # 128-aligned contraction dim
    cout_pad = _round_up(Cout, LANE)      # lane-dense output tiles

    # 256-wide Cout tiles feed the v6e/v7x MXU fully and halve patch re-DMA;
    # keep 128 for narrow layers or to guarantee >=2 parallel grid blocks for
    # dual-TensorCore chips (v7x) at small batch.
    tile_c = 256 if cout_pad >= 256 else LANE
    if N * (cout_pad // tile_c) < 2 and cout_pad // LANE >= 2:
        tile_c = LANE

    if P <= SLAB:
        tile_p = _round_up(P, 16)         # bf16 vreg = (16, 128)
        slab = tile_p
    else:
        tile_p = min(_round_up(P, SLAB), _round_up(tile_p_max, SLAB))
        slab = SLAB
    p_pad = _round_up(P, tile_p)

    # ---- VMEM budgeting (generation-aware) ----
    def est(tp, tc, ppad):
        return (2 * ppad * tc * 4         # resident f32 output block (2 bufs)
                + 2 * tp * kd_pad * 2     # patch tile, double-buffered (bf16)
                + 2 * kd_pad * tc * 2     # weight tile, double-buffered (bf16)
                + 2 * 8 * tc * 4)         # stats scratch
    budget = _vmem_budget_bytes()
    while tile_c > LANE and est(tile_p, tile_c, p_pad) > budget:
        tile_c //= 2
    while tile_p > slab and est(tile_p, tile_c, p_pad) > budget:
        tile_p -= slab
        p_pad = _round_up(P, tile_p)
    # TODO(synk): two-pass fallback (stream y to HBM, separate elementwise
    # normalize+activation kernel) when the resident f32 output alone exceeds
    # VMEM (very large spatial on v7x's 64 MiB).

    patches = jnp.pad(patches, ((0, 0), (0, p_pad - P), (0, kd_pad - Kd)))

    w_mat = weight.reshape(Cout, Kd)
    w_mat = jnp.pad(w_mat, ((0, cout_pad - Cout), (0, kd_pad - Kd)))
    w_mat = w_mat.T.astype(jnp.bfloat16)                 # (kd_pad, cout_pad)

    grid = (N, cout_pad // tile_c, p_pad // tile_p)
    kernel = functools.partial(_convblock_kernel, tile_p=tile_p, slab=slab,
                               p_real=P, eps=eps, activation=activation)

    need = est(tile_p, tile_c, p_pad)
    vmem_limit = int(min(budget, max(need * 1.5, 32 * 1024 * 1024)))

    out = pl.pallas_call(
        kernel,
        out_shape=jax.ShapeDtypeStruct((N, p_pad, cout_pad), jnp.float32),
        grid_spec=pltpu.PrefetchScalarGridSpec(
            num_scalar_prefetch=0,
            grid=grid,
            in_specs=[
                pl.BlockSpec((pl.Squeezed(), tile_p, kd_pad),
                             lambda n, c, p: (n, p, 0)),
                pl.BlockSpec((kd_pad, tile_c),
                             lambda n, c, p: (0, c)),
            ],
            # Resident across the P axis; written back once per (n, c) block.
            out_specs=pl.BlockSpec((pl.Squeezed(), p_pad, tile_c),
                                   lambda n, c, p: (n, 0, c)),
            scratch_shapes=[
                pltpu.VMEM((8, tile_c), jnp.float32),   # partial sum
                pltpu.VMEM((8, tile_c), jnp.float32),   # partial sum of squares
            ],
        ),
        compiler_params=pltpu.CompilerParams(
            dimension_semantics=("parallel", "parallel", "arbitrary"),
            vmem_limit_bytes=vmem_limit,
        ),
    )(patches, w_mat)

    out = out[:, :P, :Cout]                              # drop zero padding
    # Keep NCHW / f32 to match the PyTorch module's output exactly.
    return jnp.transpose(out.reshape(N, Ho, Wo, Cout), (0, 3, 1, 2))


# ----------------------------- reference (JAX) -------------------------------
def convblock_reference(x, weight, bias, *, stride=2, padding=1):
    y = lax.conv_general_dilated(
        x, weight, window_strides=(stride, stride),
        padding=((padding, padding), (padding, padding)),
        dimension_numbers=("NCHW", "OIHW", "NCHW"))
    y = y + bias.reshape(1, -1, 1, 1)          # reference keeps the bias
    mean = jnp.mean(y, axis=(2, 3), keepdims=True)
    var = jnp.mean((y - mean) ** 2, axis=(2, 3), keepdims=True)
    yn = (y - mean) * lax.rsqrt(var + 1e-5)
    return jnp.maximum(yn, 0.0)


if __name__ == "__main__":
    key = jax.random.PRNGKey(0)
    k_x, k_w, k_b = jax.random.split(key, 3)

    N, Cin, H, W = 2, 4, 16, 16
    Cout, K = 8, 3

    x = jax.random.normal(k_x, (N, Cin, H, W), dtype=jnp.float32)
    fan_in = Cin * K * K
    bound = 1.0 / (fan_in ** 0.5)
    weight = jax.random.uniform(k_w, (Cout, Cin, K, K), jnp.float32,
                                minval=-bound, maxval=bound)
    bias = jax.random.uniform(k_b, (Cout,), jnp.float32,
                              minval=-bound, maxval=bound)

    out = jax.block_until_ready(convblock_forward(x, weight, bias))
    ref = jax.block_until_ready(convblock_reference(x, weight, bias))

    assert out.shape == (N, Cout, H // 2, W // 2), out.shape
    err = float(jnp.max(jnp.abs(out - ref)))
    # bf16 matmul operands vs f32 reference -> loosened tolerance.
    assert err < 5e-2, err
    print("KERNEL_OK")
</pallas_src>

<mosaic_0001>
module attributes {stable_mosaic.version = 11 : i64} {
  func.func @_convblock_kernel(%arg0: i32, %arg1: i32, %arg2: i32, %arg3: memref<1x64x128xbf16, #tpu.memory_space<vmem>>, %arg4: memref<128x128xbf16, #tpu.memory_space<vmem>>, %arg5: memref<1x64x128xf32, #tpu.memory_space<vmem>>, %arg6: memref<8x128xf32, #tpu.memory_space<vmem>>, %arg7: memref<8x128xf32, #tpu.memory_space<vmem>>) attributes {dimension_semantics = [#tpu.dimension_semantics<parallel>, #tpu.dimension_semantics<parallel>, #tpu.dimension_semantics<arbitrary>], iteration_bounds = array<i64: 2, 1, 1>, scalar_prefetch = 0 : i64, scratch_operands = 2 : i64, tpu.core_type = #tpu.core_type<tc>, window_params = [{transform_indices = @transform_0, window_bounds = array<i64: 1, 64, 128>}, {transform_indices = @transform_1, window_bounds = array<i64: 128, 128>}, {transform_indices = @transform_2, window_bounds = array<i64: 1, 64, 128>}]} {
    %c0_i32 = arith.constant 0 : i32
    %0 = arith.cmpi eq, %arg2, %c0_i32 : i32
    %1 = arith.extui %0 : i1 to i32
    %c0_i32_0 = arith.constant 0 : i32
    %2 = arith.cmpi ne, %1, %c0_i32_0 : i32
    scf.if %2 {
      %cst_20 = arith.constant 0.000000e+00 : f32
      %27 = vector.broadcast %cst_20 : f32 to vector<8x128xf32>
      %c0_21 = arith.constant 0 : index
      %c0_22 = arith.constant 0 : index
      %28 = vector.load %arg6[%c0_21, %c0_22] : memref<8x128xf32, #tpu.memory_space<vmem>>, vector<8x128xf32>
      tpu.vector_store %arg6[%c0_21, %c0_22], %27 {strides = array<i32>} : memref<8x128xf32, #tpu.memory_space<vmem>>, vector<8x128xf32>,
      %cst_23 = arith.constant 0.000000e+00 : f32
      %29 = vector.broadcast %cst_23 : f32 to vector<8x128xf32>
      %c0_24 = arith.constant 0 : index
      %c0_25 = arith.constant 0 : index
      %30 = vector.load %arg7[%c0_24, %c0_25] : memref<8x128xf32, #tpu.memory_space<vmem>>, vector<8x128xf32>
      tpu.vector_store %arg7[%c0_24, %c0_25], %29 {strides = array<i32>} : memref<8x128xf32, #tpu.memory_space<vmem>>, vector<8x128xf32>,
    } else {
    }
    %c64_i32 = arith.constant 64 : i32
    %3 = arith.muli %arg2, %c64_i32 : i32
    %4 = tpu.assume_multiple %3, 64 : i32
    %c0 = arith.constant 0 : index
    %c0_1 = arith.constant 0 : index
    %c0_2 = arith.constant 0 : index
    %5 = vector.load %arg3[%c0, %c0_1, %c0_2] : memref<1x64x128xbf16, #tpu.memory_space<vmem>>, vector<1x64x128xbf16>
    %6 = vector.shape_cast %5 : vector<1x64x128xbf16> to vector<64x128xbf16>
    %c0_3 = arith.constant 0 : index
    %c0_4 = arith.constant 0 : index
    %7 = vector.load %arg4[%c0_3, %c0_4] : memref<128x128xbf16, #tpu.memory_space<vmem>>, vector<128x128xbf16>
    %cst = arith.constant dense<0.000000e+00> : vector<64x128xf32>
    %8 = tpu.matmul %6, %7, %cst {dimension_numbers = #tpu.dot_dimension_numbers<[1], [0], [0], [1], [0, 0, 1, 1], [], []>} : vector<64x128xbf16>, vector<128x128xbf16>, vector<64x128xf32> -> vector<64x128xf32>
    %9 = vector.shape_cast %8 : vector<64x128xf32> to vector<8x8x128xf32>
    %c0_5 = arith.constant 0 : index
    %c0_6 = arith.constant 0 : index
    %10 = vector.load %arg6[%c0_5, %c0_6] : memref<8x128xf32, #tpu.memory_space<vmem>>, vector<8x128xf32>
    %cst_7 = arith.constant dense<0.000000e+00> : vector<8x128xf32>
    %11 = vector.multi_reduction <add>, %9, %cst_7 [0] : vector<8x8x128xf32> to vector<8x128xf32>
    %12 = arith.addf %10, %11 : vector<8x128xf32>
    %c0_8 = arith.constant 0 : index
    %c0_9 = arith.constant 0 : index
    %13 = vector.load %arg6[%c0_8, %c0_9] : memref<8x128xf32, #tpu.memory_space<vmem>>, vector<8x128xf32>
    tpu.vector_store %arg6[%c0_8, %c0_9], %12 {strides = array<i32>} : memref<8x128xf32, #tpu.memory_space<vmem>>, vector<8x128xf32>,
    %c0_10 = arith.constant 0 : index
    %c0_11 = arith.constant 0 : index
    %14 = vector.load %arg7[%c0_10, %c0_11] : memref<8x128xf32, #tpu.memory_space<vmem>>, vector<8x128xf32>
    %15 = arith.mulf %9, %9 : vector<8x8x128xf32>
    %cst_12 = arith.constant dense<0.000000e+00> : vector<8x128xf32>
    %16 = vector.multi_reduction <add>, %15, %cst_12 [0] : vector<8x8x128xf32> to vector<8x128xf32>
    %17 = arith.addf %14, %16 : vector<8x128xf32>
    %c0_13 = arith.constant 0 : index
    %c0_14 = arith.constant 0 : index
    %18 = vector.load %arg7[%c0_13, %c0_14] : memref<8x128xf32, #tpu.memory_space<vmem>>, vector<8x128xf32>
    tpu.vector_store %arg7[%c0_13, %c0_14], %17 {strides = array<i32>} : memref<8x128xf32, #tpu.memory_space<vmem>>, vector<8x128xf32>,
    %c0_i32_15 = arith.constant 0 : i32
    %19 = arith.addi %4, %c0_i32_15 : i32
    %c0_16 = arith.constant 0 : index
    %20 = arith.index_cast %19 : i32 to index
    %c0_17 = arith.constant 0 : index
    %21 = vector.load %arg5[%c0_16, %20, %c0_17] : memref<1x64x128xf32, #tpu.memory_space<vmem>>, vector<1x64x128xf32>
    %22 = vector.shape_cast %21 : vector<1x64x128xf32> to vector<64x128xf32>
    %23 = vector.shape_cast %8 : vector<64x128xf32> to vector<1x64x128xf32>
    tpu.vector_store %arg5[%c0_16, %20, %c0_17], %23 {strides = array<i32>} : memref<1x64x128xf32, #tpu.memory_space<vmem>>, vector<1x64x128xf32>,
    %c0_i32_18 = arith.constant 0 : i32
    %24 = arith.cmpi eq, %arg2, %c0_i32_18 : i32
    %25 = arith.extui %24 : i1 to i32
    %c0_i32_19 = arith.constant 0 : i32
    %26 = arith.cmpi ne, %25, %c0_i32_19 : i32
    scf.if %26 {
      %c0_20 = arith.constant 0 : index
      %c0_21 = arith.constant 0 : index
      %27 = vector.load %arg6[%c0_20, %c0_21] : memref<8x128xf32, #tpu.memory_space<vmem>>, vector<8x128xf32>
      %cst_22 = arith.constant dense<0.000000e+00> : vector<128xf32>
      %28 = vector.multi_reduction <add>, %27, %cst_22 [0] : vector<8x128xf32> to vector<128xf32>
      %29 = vector.shape_cast %28 : vector<128xf32> to vector<1x128xf32>
      %cst_23 = arith.constant 1.562500e-02 : f32
      %30 = vector.broadcast %cst_23 : f32 to vector<1x128xf32>
      %31 = arith.mulf %29, %30 : vector<1x128xf32>
      %c0_24 = arith.constant 0 : index
      %c0_25 = arith.constant 0 : index
      %32 = vector.load %arg7[%c0_24, %c0_25] : memref<8x128xf32, #tpu.memory_space<vmem>>, vector<8x128xf32>
      %cst_26 = arith.constant dense<0.000000e+00> : vector<128xf32>
      %33 = vector.multi_reduction <add>, %32, %cst_26 [0] : vector<8x128xf32> to vector<128xf32>
      %34 = vector.shape_cast %33 : vector<128xf32> to vector<1x128xf32>
      %cst_27 = arith.constant 1.562500e-02 : f32
      %35 = vector.broadcast %cst_27 : f32 to vector<1x128xf32>
      %36 = arith.mulf %34, %35 : vector<1x128xf32>
      %37 = arith.mulf %31, %31 : vector<1x128xf32>
      %38 = arith.subf %36, %37 : vector<1x128xf32>
      %cst_28 = arith.constant 0.000000e+00 : f32
      %39 = vector.broadcast %cst_28 : f32 to vector<1x128xf32>
      %40 = arith.maximumf %38, %39 : vector<1x128xf32>
      %cst_29 = arith.constant 9.99999974E-6 : f32
      %41 = vector.broadcast %cst_29 : f32 to vector<1x128xf32>
      %42 = arith.addf %40, %41 : vector<1x128xf32>
      %43 = math.rsqrt %42 : vector<1x128xf32>
      %c0_30 = arith.constant 0 : index
      %c0_31 = arith.constant 0 : index
      %c0_32 = arith.constant 0 : index
      %44 = vector.load %arg5[%c0_30, %c0_31, %c0_32] : memref<1x64x128xf32, #tpu.memory_space<vmem>>, vector<1x64x128xf32>
      %45 = vector.shape_cast %44 : vector<1x64x128xf32> to vector<64x128xf32>
      %46 = vector.broadcast %31 : vector<1x128xf32> to vector<64x128xf32>
      %47 = arith.subf %45, %46 : vector<64x128xf32>
      %48 = vector.broadcast %43 : vector<1x128xf32> to vector<64x128xf32>
      %49 = arith.mulf %47, %48 : vector<64x128xf32>
      %cst_33 = arith.constant 0.000000e+00 : f32
      %50 = vector.broadcast %cst_33 : f32 to vector<64x128xf32>
      %51 = arith.maximumf %49, %50 : vector<64x128xf32>
      %c0_34 = arith.constant 0 : index
      %c0_35 = arith.constant 0 : index
      %c0_36 = arith.constant 0 : index
      %52 = vector.load %arg5[%c0_34, %c0_35, %c0_36] : memref<1x64x128xf32, #tpu.memory_space<vmem>>, vector<1x64x128xf32>
      %53 = vector.shape_cast %52 : vector<1x64x128xf32> to vector<64x128xf32>
      %54 = vector.shape_cast %51 : vector<64x128xf32> to vector<1x64x128xf32>
      tpu.vector_store %arg5[%c0_34, %c0_35, %c0_36], %54 {strides = array<i32>} : memref<1x64x128xf32, #tpu.memory_space<vmem>>, vector<1x64x128xf32>,
    } else {
    }
    return
  }
  func.func @transform_0(%arg0: i32, %arg1: i32, %arg2: i32) -> (i32, i32, i32) {
    %c0_i32 = arith.constant 0 : i32
    %c0_i32_0 = arith.constant 0 : i32
    return %arg0, %arg2, %c0_i32 : i32, i32, i32
  }
  func.func @transform_1(%arg0: i32, %arg1: i32, %arg2: i32) -> (i32, i32) {
    %c0_i32 = arith.constant 0 : i32
    %c0_i32_0 = arith.constant 0 : i32
    return %c0_i32, %arg1 : i32, i32
  }
  func.func @transform_2(%arg0: i32, %arg1: i32, %arg2: i32) -> (i32, i32, i32) {
    %c0_i32 = arith.constant 0 : i32
    %c0_i32_0 = arith.constant 0 : i32
    return %arg0, %c0_i32, %arg1 : i32, i32, i32
  }
}

</mosaic_0001>

<llo_original>
// kernel: tpu_custom_call.1
$region0: #{tpu_custom_call.1}
  #allocation0 [shape = 'u32[]', space=smem, size = 0x4, offset = 0x4, fixed_abs, tag = 'smem constant byte address 0x4 - core index']
  #allocation1 [shape = 'u32[144,128]{1,0:T(1,128)}', space=vmem, size = 0x12000, scoped, tag = 'internal scratch']
  #allocation2 [shape = 'f32[8,128]{1,0:T(8,128)}', space=vmem, size = 0x1000, scoped, tag = 'scratch operand']
  #allocation3 [shape = 'f32[8,128]{1,0:T(8,128)}', space=vmem, size = 0x1000, scoped, tag = 'scratch operand']
  %s0 = inlined_call_operand.hbm [shape: bf16[2,64,128], index: 0, kind: input, shape index: {}]
  %s1 = inlined_call_operand.hbm [shape: bf16[128,128], index: 1, kind: input, shape index: {}]
  %s2 = inlined_call_operand.hbm [shape: f32[2,64,128], index: 2, kind: output, shape index: {}]
  %s3 = sld [smem:[#allocation0]]
  $region57: #{tpu_custom_call.1} parent=0
    _
  %s5 = ssub.s32 1, %s3
  %s6 = scalar_select 0, %s5, %s3
  $region1: #{tpu_custom_call.1} parent=0
    #allocation4 [shape = 'u8[32768]{0}', space=vmem, size = 0x8000, scoped, tag = 'input window, operand 0']
    #allocation5 [shape = 's32[2]{0}', space=sflag, size = 0x8, scoped, tag = 'scoped memory for tpu_custom_call.1']
    #allocation6 [shape = 's32[2]{0}', space=sflag, size = 0x8, scoped, tag = 'scoped memory for tpu_custom_call.1']
    #allocation7 [shape = 'u8[32768]{0}', space=vmem, size = 0x8000, scoped, tag = 'input window, operand 1, single buffered']
    #allocation8 [shape = 's32[1]{0}', space=sflag, size = 0x4, scoped, tag = 'scoped memory for tpu_custom_call.1']
    #allocation9 [shape = 'u8[65536]{0}', space=vmem, size = 0x10000, scoped, tag = 'output window, operand 0']
    %7 = vsyncpa [#allocation5], 0
    %s8 = scalar_lea.sflag [#allocation5], 1
    %9 = vsyncpa %s8, 0
    %10 = vsyncpa [#allocation8], 0
    %11 = vsyncpa [#allocation6], 0
    %s12 = scalar_lea.sflag [#allocation6], 1
    %13 = vsyncpa %s12, 0
    loop: start=0, step=1, limit=4
    $region2: #{tpu_custom_call.1} parent=1 // loop_pre_header
      _
    $region3: #{tpu_custom_call.1} parent=1 // loop_header
      %s15 = sphi 0, %s19
      %p16 = scmp.ge.s32.totalorder %s15, 4
      %s22 = sphi 0, %s41
      %s23 = sphi 0, %s37
      %s24 = sphi 0, %s33
      %s25 = sphi 0, %s22
      %s26 = sphi 0, %s23
      %s27 = sphi 0, %s24
      %s28 = sphi 0, %s25
      %s29 = sphi 0, %s26
      %s30 = sphi 0, %s27
      %s46 = sphi 0, %s48
      %s49 = sphi 0, %s46
      %s50 = sphi 0, %s49
      %s66 = sphi 0, %s50
      %s72 = sphi 0, %s74
      %s75 = sphi 0, %s72
      %s76 = sphi 0, %s75
      %s92 = sphi 0, %s76
      %s100 = sphi 0, %s102
      %s103 = sphi 0, %s100
      %s104 = sphi 0, %s103
      %s120 = sphi 0, %s104
    $region4: #{tpu_custom_call.1} parent=1 // loop_header_branch
      %18 = sbr.rel (%p16) target = $region8
    $region5: #{tpu_custom_call.1} parent=1 // loop_body
      %s20 = ssub.s32 %s15, 1
      %s21 = ssub.s32 %s15, 2
      %s31 = sadd.s32 1, %s24
      %p32 = scmp.ge.s32.totalorder %s31, 1
      %s33 = scalar_select %p32, 0, %s31
      %s34 = sadd.s32 1, %s23
      %s35 = scalar_select %p32, %s34, %s23
      %p36 = scmp.ge.s32.totalorder %s35, 1
      %s37 = scalar_select %p36, 0, %s35
      %s38 = sadd.s32 1, %s22
      %s39 = scalar_select %p36, %s38, %s22
      %p40 = scmp.ge.s32.totalorder %s39, 2
      %s41 = scalar_select %p40, 0, %s39
      %s42 = ssub.s32 %s22, %s41
      %s43 = ssub.s32 %s24, %s33
      %s44 = sor.u32 %s42, %s43
      %p45 = scmp.eq.s32.totalorder %s44, 0
      %s47 = sadd.s32 %s46, 1
      %s48 = scalar_select %p45, %s46, %s47
      %p51 = pneg %p45
      %p52 = scmp.eq.s32.totalorder %s15, 1
      %p53 = por %p51, %p52
      %p54 = scmp.ne.s32.totalorder %s46, %s49
      %p55 = scmp.eq.s32.totalorder %s15, 0
      %p56 = por %p54, %p55
      %p57 = scmp.ne.s32.totalorder %s46, %s49
      %p58 = scmp.eq.s32.totalorder %s20, 1
      %p59 = por %p57, %p58
      %p60 = scmp.ne.s32.totalorder %s49, %s50
      %p61 = scmp.eq.s32.totalorder %s20, 0
      %p62 = por %p60, %p61
      %p63 = scmp.ne.s32.totalorder %s49, %s50
      %p64 = scmp.eq.s32.totalorder %s21, 1
      %p65 = por %p63, %p64
      %p67 = scmp.ne.s32.totalorder %s50, %s66
      %p68 = scmp.eq.s32.totalorder %s21, 0
      %p69 = por %p67, %p68
      %s70 = ssub.s32 %s23, %s37
      %p71 = scmp.eq.s32.totalorder %s70, 0
      %s73 = sadd.s32 %s72, 1
      %s74 = scalar_select %p71, %s72, %s73
      %p77 = pneg %p71
      %p78 = scmp.eq.s32.totalorder %s15, 1
      %p79 = por %p77, %p78
      %p80 = scmp.ne.s32.totalorder %s72, %s75
      %p81 = scmp.eq.s32.totalorder %s15, 0
      %p82 = por %p80, %p81
      %p83 = scmp.ne.s32.totalorder %s72, %s75
      %p84 = scmp.eq.s32.totalorder %s20, 1
      %p85 = por %p83, %p84
      %p86 = scmp.ne.s32.totalorder %s75, %s76
      %p87 = scmp.eq.s32.totalorder %s20, 0
      %p88 = por %p86, %p87
      %p89 = scmp.ne.s32.totalorder %s75, %s76
      %p90 = scmp.eq.s32.totalorder %s21, 1
      %p91 = por %p89, %p90
      %p93 = scmp.ne.s32.totalorder %s76, %s92
      %p94 = scmp.eq.s32.totalorder %s21, 0
      %p95 = por %p93, %p94
      %s96 = ssub.s32 %s22, %s41
      %s97 = ssub.s32 %s23, %s37
      %s98 = sor.u32 %s96, %s97
      %p99 = scmp.eq.s32.totalorder %s98, 0
      %s101 = sadd.s32 %s100, 1
      %s102 = scalar_select %p99, %s100, %s101
      %p105 = pneg %p99
      %p106 = scmp.eq.s32.totalorder %s15, 1
      %p107 = por %p105, %p106
      %p108 = scmp.ne.s32.totalorder %s100, %s103
      %p109 = scmp.eq.s32.totalorder %s15, 0
      %p110 = por %p108, %p109
      %p111 = scmp.ne.s32.totalorder %s100, %s103
      %p112 = scmp.eq.s32.totalorder %s20, 1
      %p113 = por %p111, %p112
      %p114 = scmp.ne.s32.totalorder %s103, %s104
      %p115 = scmp.eq.s32.totalorder %s20, 0
      %p116 = por %p114, %p115
      %p117 = scmp.ne.s32.totalorder %s103, %s104
      %p118 = scmp.eq.s32.totalorder %s21, 1
      %p119 = por %p117, %p118
      %p121 = scmp.ne.s32.totalorder %s104, %s120
      %p122 = scmp.eq.s32.totalorder %s21, 0
      %p123 = por %p121, %p122
      %p124 = scmp.le.s32.totalorder 1, %s15
      %p125 = scmp.lt.s32.totalorder %s15, 3
      %p126 = pnand %p124, %p125
      %p127 = pneg %p126
      // Predicated region
      $region9: #{tpu_custom_call.1} parent=5 // pred_check
        _
      $region10: #{tpu_custom_call.1} parent=5 // pred_check_branch
        %129 = sbr.rel (%p126) target = $region12
      $region11: #{tpu_custom_call.1} parent=5 // pred_region
        %s130 = ssub.s32 %s15, 1
        // Predicated region
        $region13: #{tpu_custom_call.1} parent=11 // pred_check
          %p131 = pneg %p88
        $region14: #{tpu_custom_call.1} parent=11 // pred_check_branch
          %133 = sbr.rel (%p131) target = $region16
        $region15: #{tpu_custom_call.1} parent=11 // pred_region
          %s135 = ssub.s32 1024, 1024
          %136 = vsyncadd [#allocation8], %s135
          %s137 = smul.addr %s26, 64
          %s138 = scalar_lea.hbm %s1, %s137
          %s139 = sshll.u32 [#allocation7], 4
          %s140 = int_to_ptr.vmem [resolvable:$true] %s139
          %145 = dma.hbm_to_vmem [thread:$0]  %s138, 1024, %s140, [#allocation8], 64, 64, 4
        $region16: #{tpu_custom_call.1} parent=11 // pred_fallthru
          _
      $region12: #{tpu_custom_call.1} parent=5 // pred_fallthru
        _
      %p146 = scmp.lt.s32.totalorder %s15, 2
      // Predicated region
      $region17: #{tpu_custom_call.1} parent=5 // pred_check
        %p147 = pneg %p146
      $region18: #{tpu_custom_call.1} parent=5 // pred_check_branch
        %149 = sbr.rel (%p147) target = $region20
      $region19: #{tpu_custom_call.1} parent=5 // pred_region
        // Predicated region
        $region21: #{tpu_custom_call.1} parent=19 // pred_check
          %p150 = pneg %p56
        $region22: #{tpu_custom_call.1} parent=19 // pred_check_branch
          %152 = sbr.rel (%p150) target = $region24
        $region23: #{tpu_custom_call.1} parent=19 // pred_region
          %s153 = sand.u32 %s46, 1
          %s154 = scalar_lea.sflag [#allocation5], %s153
          %s155 = sand.u32 %s46, 1
          %s156 = smul.addr %s155, 32
          %s157 = scalar_lea.vmem [#allocation4], %s156
          %s158 = smul.u32 8, %s24
          %s160 = ssub.s32 512, 512
          %161 = vsyncadd %s154, %s160
          %s162 = smul.addr %s22, 8
          %s163 = sadd.s32 %s158, %s162
          %s164 = smul.addr %s163, 64
          %s165 = scalar_lea.hbm %s0, %s164
          %s166 = sshll.u32 %s157, 4
          %s167 = int_to_ptr.vmem [resolvable:$true] %s166
          %172 = dma.hbm_to_vmem [thread:$0]  %s165, 512, %s167, %s154, 64, 64, 4
        $region24: #{tpu_custom_call.1} parent=19 // pred_fallthru
          _
      $region20: #{tpu_custom_call.1} parent=5 // pred_fallthru
        _
      %p173 = scmp.le.s32.totalorder 1, %s15
      %p174 = scmp.lt.s32.totalorder %s15, 3
      %p175 = pnand %p173, %p174
      %p176 = pneg %p175
      // Predicated region
      $region25: #{tpu_custom_call.1} parent=5 // pred_check
        _
      $region26: #{tpu_custom_call.1} parent=5 // pred_check_branch
        %178 = sbr.rel (%p175) target = $region28
      $region27: #{tpu_custom_call.1} parent=5 // pred_region
        %s179 = ssub.s32 %s15, 1
        %s180 = sand.u32 %s49, 1
        %s181 = scalar_lea.sflag [#allocation5], %s180
        %s182 = sand.u32 %s49, 1
        %s183 = smul.addr %s182, 32
        %s184 = scalar_lea.vmem [#allocation4], %s183
        // Predicated region
        $region29: #{tpu_custom_call.1} parent=27 // pred_check
          %p185 = pneg %p62
        $region30: #{tpu_custom_call.1} parent=27 // pred_check_branch
          %187 = sbr.rel (%p185) target = $region32
        $region31: #{tpu_custom_call.1} parent=27 // pred_region
          %188 = dma.done %s181, 512
        $region32: #{tpu_custom_call.1} parent=27 // pred_fallthru
          _
        // Predicated region
        $region33: #{tpu_custom_call.1} parent=27 // pred_check
          %p189 = pneg %p88
        $region34: #{tpu_custom_call.1} parent=27 // pred_check_branch
          %191 = sbr.rel (%p189) target = $region36
        $region35: #{tpu_custom_call.1} parent=27 // pred_region
          %192 = dma.done [#allocation8], 1024
        $region36: #{tpu_custom_call.1} parent=27 // pred_fallthru
          _
        %s193 = sand.u32 %s49, 1
        %s194 = scalar_lea.sflag [#allocation5], %s193
        %s195 = sand.u32 %s49, 1
        %s196 = smul.addr %s195, 32
        %s197 = scalar_lea.vmem [#allocation4], %s196
        %p198 = pneg %p62
        %p199 = pneg %p59
        %p200 = pneg %p88
        %p201 = pneg %p85
        %p202 = pneg %p116
        %p203 = pneg %p113
        %s204 = sand.u32 %s103, 1
        %s205 = scalar_lea.sflag [#allocation6], %s204
        %s206 = sand.u32 %s103, 1
        %s207 = smul.addr %s206, 64
        %s208 = scalar_lea.vmem [#allocation9], %s207
        %s209 = smul.u32 8, %s27
        %p211 = scmp.eq.s32.totalorder %s27, 0
        // Predicated region
        $region37: #{tpu_custom_call.1} parent=27 // pred_check
          %p212 = pneg %p211
        $region38: #{tpu_custom_call.1} parent=27 // pred_check_branch
          %214 = sbr.rel (%p212) target = $region40
        $region39: #{tpu_custom_call.1} parent=27 // pred_region
          %215 = vst [vmem:[#allocation2] sm:$0xff] 0.0
          %216 = vst [vmem:[#allocation3] sm:$0xff] 0.0
        $region40: #{tpu_custom_call.1} parent=27 // pred_fallthru
          _
        %s217 = smul.u32 %s27, 64
        %v218 = vld [vmem:[%s184] sm:$0xf]
        %v219 = vld [vmem:[%s184 + $0x4] sm:$0xf]
        %v220 = vld [vmem:[%s184 + $0x8] sm:$0xf]
        %v221 = vld [vmem:[%s184 + $0xc] sm:$0xf]
        %v222 = vld [vmem:[%s184 + $0x10] sm:$0xf]
        %v223 = vld [vmem:[%s184 + $0x14] sm:$0xf]
        %v224 = vld [vmem:[%s184 + $0x18] sm:$0xf]
        %v225 = vld [vmem:[%s184 + $0x1c] sm:$0xf]
        %v226 = vld [vmem:[#allocation7] sm:$0xf]
        %v227 = vld [vmem:[#allocation7 + $0x4] sm:$0xf]
        %v228 = vld [vmem:[#allocation7 + $0x8] sm:$0xf]
        %v229 = vld [vmem:[#allocation7 + $0xc] sm:$0xf]
        %v230 = vld [vmem:[#allocation7 + $0x10] sm:$0xf]
        %v231 = vld [vmem:[#allocation7 + $0x14] sm:$0xf]
        %v232 = vld [vmem:[#allocation7 + $0x18] sm:$0xf]
        %v233 = vld [vmem:[#allocation7 + $0x1c] sm:$0xf]
        %v234 = vld [vmem:[#allocation7 + $0x20] sm:$0xf]
        %v235 = vld [vmem:[#allocation7 + $0x24] sm:$0xf]
        %v236 = vld [vmem:[#allocation7 + $0x28] sm:$0xf]
        %v237 = vld [vmem:[#allocation7 + $0x2c] sm:$0xf]
        %v238 = vld [vmem:[#allocation7 + $0x30] sm:$0xf]
        %v239 = vld [vmem:[#allocation7 + $0x34] sm:$0xf]
        %v240 = vld [vmem:[#allocation7 + $0x38] sm:$0xf]
        %v241 = vld [vmem:[#allocation7 + $0x3c] sm:$0xf]
        %v250 = vunpack.c.l.b16 %v218
        %v251 = vunpack.c.l.b16 %v219
        %v252 = vunpack.c.l.b16 %v220
        %v253 = vunpack.c.l.b16 %v221
        %v254 = vunpack.c.l.b16 %v222
        %v255 = vunpack.c.l.b16 %v223
        %v256 = vunpack.c.l.b16 %v224
        %v257 = vunpack.c.l.b16 %v225
        %v258 = vpack.c.b16 %v251, %v250
        %v259 = vpack.c.b16 %v253, %v252
        %v260 = vpack.c.b16 %v255, %v254
        %v261 = vpack.c.b16 %v257, %v256
        %v282 = vunpack.c.l.b16 %v226
        %v283 = vunpack.c.l.b16 %v227
        %v284 = vunpack.c.l.b16 %v228
        %v285 = vunpack.c.l.b16 %v229
        %v286 = vunpack.c.l.b16 %v230
        %v287 = vunpack.c.l.b16 %v231
        %v288 = vunpack.c.l.b16 %v232
        %v289 = vunpack.c.l.b16 %v233
        %v290 = vunpack.c.l.b16 %v234
        %v291 = vunpack.c.l.b16 %v235
        %v292 = vunpack.c.l.b16 %v236
        %v293 = vunpack.c.l.b16 %v237
        %v294 = vunpack.c.l.b16 %v238
        %v295 = vunpack.c.l.b16 %v239
        %v296 = vunpack.c.l.b16 %v240
        %v297 = vunpack.c.l.b16 %v241
        %v298 = vpack.c.b16 %v283, %v282
        %v299 = vpack.c.b16 %v285, %v284
        %v300 = vpack.c.b16 %v287, %v286
        %v301 = vpack.c.b16 %v289, %v288
        %v302 = vpack.c.b16 %v291, %v290
        %v303 = vpack.c.b16 %v293, %v292
        %v304 = vpack.c.b16 %v295, %v294
        %v305 = vpack.c.b16 %v297, %v296
        %314 = vmatprep.subr.bf16.mxu0 0
        %315 = vmatpush1.bf16.msra.mxu0 %v305
        %316 = vmatprep.subr.bf16.mxu0 0
        %317 = vmatpush1.bf16.msra.mxu0 %v304
        %318 = vmatprep.subr.bf16.mxu0 0
        %319 = vmatpush1.bf16.msra.mxu0 %v303
        %320 = vmatprep.subr.bf16.mxu0 0
        %321 = vmatpush1.bf16.msra.mxu0 %v302
        %322 = vmatprep.subr.bf16.mxu0 0
        %323 = vmatpush1.bf16.msra.mxu0 %v301
        %324 = vmatprep.subr.bf16.mxu0 0
        %325 = vmatpush1.bf16.msra.mxu0 %v300
        %326 = vmatprep.subr.bf16.mxu0 0
        %327 = vmatpush1.bf16.msra.mxu0 %v299
        %328 = vmatprep.subr.bf16.mxu0 0
        %329 = vmatpush1.bf16.msra.mxu0 %v298
        %330 = vmatprep.subr.bf16.mxu0 0
        %331 = vmatpush2.bf16.msra.mxu0 0
        %332 = vmatprep.subr.bf16.mxu0 0
        %333 = vmatpush2.bf16.msra.mxu0 0
        %334 = vmatprep.subr.bf16.mxu0 0
        %335 = vmatpush2.bf16.msra.mxu0 0
        %336 = vmatprep.subr.bf16.mxu0 0
        %337 = vmatpush2.bf16.msra.mxu0 0
        %338 = vmatprep.subr.bf16.mxu0 0
        %339 = vmatpush2.bf16.msra.mxu0 0
        %340 = vmatprep.subr.bf16.mxu0 0
        %341 = vmatpush2.bf16.msra.mxu0 0
        %342 = vmatprep.subr.bf16.mxu0 0
        %343 = vmatpush2.bf16.msra.mxu0 0
        %344 = vmatprep.subr.bf16.mxu0 0
        %345 = vmatpush2.bf16.msra.mxu0 0
        %346 = vmatprep.mubr.bf16.mxu0 0
        %347 = vmatmul.mubr.bf16.gmra.mxu0 %v258
        %v348 = vpop.f32.mrf.mxu0
        %v349 = vadd.f32 0.0, %v348
        %v350 = vpop.f32.mrf.mxu0
        %v351 = vpop.f32.mrf.mxu0
        %v352 = vadd.f32 0.0, %v351
        %v353 = vpop.f32.mrf.mxu0
        %354 = vmatprep.mubr.bf16.mxu0 0
        %355 = vmatmul.mubr.bf16.gmra.mxu0 %v259
        %v356 = vpop.f32.mrf.mxu0
        %v357 = vadd.f32 0.0, %v356
        %v358 = vpop.f32.mrf.mxu0
        %v359 = vpop.f32.mrf.mxu0
        %v360 = vadd.f32 0.0, %v359
        %v361 = vpop.f32.mrf.mxu0
        %362 = vmatprep.mubr.bf16.mxu0 0
        %363 = vmatmul.mubr.bf16.gmra.mxu0 %v260
        %v364 = vpop.f32.mrf.mxu0
        %v365 = vadd.f32 0.0, %v364
        %v366 = vpop.f32.mrf.mxu0
        %v367 = vpop.f32.mrf.mxu0
        %v368 = vadd.f32 0.0, %v367
        %v369 = vpop.f32.mrf.mxu0
        %370 = vmatprep.mubr.bf16.mxu0 0
        %371 = vmatmul.mubr.bf16.gmra.mxu0 %v261
        %v372 = vpop.f32.mrf.mxu0
        %v373 = vadd.f32 0.0, %v372
        %v374 = vpop.f32.mrf.mxu0
        %v375 = vpop.f32.mrf.mxu0
        %v376 = vadd.f32 0.0, %v375
        %v377 = vpop.f32.mrf.mxu0
        %378 = vdwg.mxu0
        %v379 = vld [vmem:[#allocation2] sm:$0xff]
        %v380 = vadd.f32 %v349, %v352
        %v381 = vadd.f32 %v380, %v357
        %v382 = vadd.f32 %v381, %v360
        %v383 = vadd.f32 %v382, %v365
        %v384 = vadd.f32 %v383, %v368
        %v385 = vadd.f32 %v384, %v373
        %v386 = vadd.f32 %v385, %v376
        %v387 = vadd.f32 %v379, %v386
        %388 = vst [vmem:[#allocation2] sm:$0xff] %v387
        %v389 = vld [vmem:[#allocation3] sm:$0xff]
        %v390 = vmul.f32 %v349, %v349
        %v391 = vmul.f32 %v352, %v352
        %v392 = vmul.f32 %v357, %v357
        %v393 = vmul.f32 %v360, %v360
        %v394 = vmul.f32 %v365, %v365
        %v395 = vmul.f32 %v368, %v368
        %v396 = vmul.f32 %v373, %v373
        %v397 = vmul.f32 %v376, %v376
        %v398 = vadd.f32 %v390, %v391
        %v399 = vadd.f32 %v398, %v392
        %v400 = vadd.f32 %v399, %v393
        %v401 = vadd.f32 %v400, %v394
        %v402 = vadd.f32 %v401, %v395
        %v403 = vadd.f32 %v402, %v396
        %v404 = vadd.f32 %v403, %v397
        %v405 = vadd.f32 %v389, %v404
        %406 = vst [vmem:[#allocation3] sm:$0xff] %v405
        %s407 = scalar_lea.vmem %s208, %s217 [#allocation9]
        %408 = vst [vmem:[%s407] sm:$0xff] %v349
        %409 = vst [vmem:[%s407 + $0x8] sm:$0xff] %v352
        %410 = vst [vmem:[%s407 + $0x10] sm:$0xff] %v357
        %411 = vst [vmem:[%s407 + $0x18] sm:$0xff] %v360
        %412 = vst [vmem:[%s407 + $0x20] sm:$0xff] %v365
        %413 = vst [vmem:[%s407 + $0x28] sm:$0xff] %v368
        %414 = vst [vmem:[%s407 + $0x30] sm:$0xff] %v373
        %415 = vst [vmem:[%s407 + $0x38] sm:$0xff] %v376
        // Predicated region
        $region41: #{tpu_custom_call.1} parent=27 // pred_check
          %p416 = pneg %p211
        $region42: #{tpu_custom_call.1} parent=27 // pred_check_branch
          %418 = sbr.rel (%p416) target = $region44
        $region43: #{tpu_custom_call.1} parent=27 // pred_region
          %v419 = vld [vmem:[#allocation2] sm:$0xff]
          %v420 = vrot.slane %v419, 4
          %v421 = vadd.f32 %v419, %v420
          %v422 = vrot.slane %v421, 2
          %v423 = vadd.f32 %v421, %v422
          %v424 = vrot.slane %v423, 1
          %v425 = vadd.f32 %v423, %v424
          %v426 = vmul.f32 %v425, 0.015625
          %v427 = vld [vmem:[#allocation3] sm:$0xff]
          %v428 = vrot.slane %v427, 4
          %v429 = vadd.f32 %v427, %v428
          %v430 = vrot.slane %v429, 2
          %v431 = vadd.f32 %v429, %v430
          %v432 = vrot.slane %v431, 1
          %v433 = vadd.f32 %v431, %v432
          %v434 = vmul.f32 %v433, 0.015625
          %v435 = vmul.f32 %v426, %v426
          %v436 = vsub.f32 %v434, %v435
          %v437 = vmax.f32 %v436, 0.0
          %v438 = vadd.f32 %v437, 1e-05
          %v439 = vrsqrt.pop %v438
          %v440 = vld [vmem:[%s208] sm:$0xff]
          %v441 = vld [vmem:[%s208 + $0x8] sm:$0xff]
          %v442 = vld [vmem:[%s208 + $0x10] sm:$0xff]
          %v443 = vld [vmem:[%s208 + $0x18] sm:$0xff]
          %v444 = vld [vmem:[%s208 + $0x20] sm:$0xff]
          %v445 = vld [vmem:[%s208 + $0x28] sm:$0xff]
          %v446 = vld [vmem:[%s208 + $0x30] sm:$0xff]
          %v447 = vld [vmem:[%s208 + $0x38] sm:$0xff]
          %v448 = vsub.f32 %v440, %v426
          %v449 = vsub.f32 %v441, %v426
          %v450 = vsub.f32 %v442, %v426
          %v451 = vsub.f32 %v443, %v426
          %v452 = vsub.f32 %v444, %v426
          %v453 = vsub.f32 %v445, %v426
          %v454 = vsub.f32 %v446, %v426
          %v455 = vsub.f32 %v447, %v426
          %v456 = vmul.f32 %v448, %v439
          %v457 = vmul.f32 %v449, %v439
          %v458 = vmul.f32 %v450, %v439
          %v459 = vmul.f32 %v451, %v439
          %v460 = vmul.f32 %v452, %v439
          %v461 = vmul.f32 %v453, %v439
          %v462 = vmul.f32 %v454, %v439
          %v463 = vmul.f32 %v455, %v439
          %v464 = vmax.f32 %v456, 0.0
          %v465 = vmax.f32 %v457, 0.0
          %v466 = vmax.f32 %v458, 0.0
          %v467 = vmax.f32 %v459, 0.0
          %v468 = vmax.f32 %v460, 0.0
          %v469 = vmax.f32 %v461, 0.0
          %v470 = vmax.f32 %v462, 0.0
          %v471 = vmax.f32 %v463, 0.0
          %472 = vst [vmem:[%s208] sm:$0xff] %v464
          %473 = vst [vmem:[%s208 + $0x8] sm:$0xff] %v465
          %474 = vst [vmem:[%s208 + $0x10] sm:$0xff] %v466
          %475 = vst [vmem:[%s208 + $0x18] sm:$0xff] %v467
          %476 = vst [vmem:[%s208 + $0x20] sm:$0xff] %v468
          %477 = vst [vmem:[%s208 + $0x28] sm:$0xff] %v469
          %478 = vst [vmem:[%s208 + $0x30] sm:$0xff] %v470
          %479 = vst [vmem:[%s208 + $0x38] sm:$0xff] %v471
        $region44: #{tpu_custom_call.1} parent=27 // pred_fallthru
          _
        %s480 = sand.u32 %s103, 1
        %s481 = scalar_lea.sflag [#allocation6], %s480
        %s482 = sand.u32 %s103, 1
        %s483 = smul.addr %s482, 64
        %s484 = scalar_lea.vmem [#allocation9], %s483
        // Predicated region
        $region45: #{tpu_custom_call.1} parent=27 // pred_check
          %p485 = pneg %p113
        $region46: #{tpu_custom_call.1} parent=27 // pred_check_branch
          %487 = sbr.rel (%p485) target = $region48
        $region47: #{tpu_custom_call.1} parent=27 // pred_region
          %s489 = ssub.s32 1024, 1024
          %490 = vsyncadd %s481, %s489
          %s491 = smul.addr %s25, 8
          %s492 = sadd.s32 %s26, %s491
          %s493 = smul.addr %s492, 128
          %s494 = scalar_lea.hbm %s2, %s493
          %s495 = sshll.u32 %s484, 4
          %s496 = int_to_ptr.vmem [resolvable:$true] %s495
          %501 = dma.vmem_to_hbm [thread:$0]  %s496, 1024, %s494, %s481, 128, 128, 8
        $region48: #{tpu_custom_call.1} parent=27 // pred_fallthru
          _
      $region28: #{tpu_custom_call.1} parent=5 // pred_fallthru
        _
      %p502 = scmp.le.s32.totalorder 2, %s15
      // Predicated region
      $region49: #{tpu_custom_call.1} parent=5 // pred_check
        %p503 = pneg %p502
      $region50: #{tpu_custom_call.1} parent=5 // pred_check_branch
        %505 = sbr.rel (%p503) target = $region52
      $region51: #{tpu_custom_call.1} parent=5 // pred_region
        %s506 = ssub.s32 %s15, 2
        // Predicated region
        $region53: #{tpu_custom_call.1} parent=51 // pred_check
          %p507 = pneg %p119
        $region54: #{tpu_custom_call.1} parent=51 // pred_check_branch
          %509 = sbr.rel (%p507) target = $region56
        $region55: #{tpu_custom_call.1} parent=51 // pred_region
          %s510 = sand.u32 %s104, 1
          %s511 = scalar_lea.sflag [#allocation6], %s510
          %s512 = sand.u32 %s104, 1
          %s513 = smul.addr %s512, 64
          %s514 = scalar_lea.vmem [#allocation9], %s513
          %515 = dma.done %s511, 1024
        $region56: #{tpu_custom_call.1} parent=51 // pred_fallthru
          _
      $region52: #{tpu_custom_call.1} parent=5 // pred_fallthru
        _
    $region6: #{tpu_custom_call.1} parent=1 // loop_footer
      %s19 = sadd.s32 1, %s15
    $region7: #{tpu_custom_call.1} parent=1 // loop_footer_branch
      %14 = sbr.rel target = $region3
    $region8: #{tpu_custom_call.1} parent=1 // loop_exit
      _
    %516 = vsyncpa [#allocation5], 1
    %s517 = scalar_lea.sflag [#allocation5], 1
    %518 = vsyncpa %s517, 1
    %519 = vsyncpa [#allocation8], 1
    %520 = vsyncpa [#allocation6], 1
    %s521 = scalar_lea.sflag [#allocation6], 1
    %522 = vsyncpa %s521, 1

</llo_original>
